<compile_context>
chip_gen: v5e
topology: v5e:2x2
jax: 0.10.0
libtpu: 0.0.40
codegen_flags: <defaults>
</compile_context>

<pallas_src>
import jax
import jax.numpy as jnp
from jax.experimental import pallas as pl
from jax.experimental.pallas import tpu as pltpu


_LANE = 128     # lane width (last dim)
_SUBLANE = 8    # f32 sublane (second-to-last dim)


def _round_up(x, m):
    return ((x + m - 1) // m) * m


def _critic_kernel(s_ref, a_ref, w1s_ref, w1a_ref, b1_ref,
                   w2_ref, b2_ref, w3_ref, b3_ref, o_ref):
    # fc1 split over the concat boundary: cat([s, a]) @ W1 == s @ W1s + a @ W1a.
    h1 = jnp.dot(s_ref[...], w1s_ref[...], preferred_element_type=jnp.float32)
    h1 = h1 + jnp.dot(a_ref[...], w1a_ref[...],
                      preferred_element_type=jnp.float32)
    h1 = jnp.maximum(h1 + b1_ref[...], 0.0)

    # fc2 + relu (f32 accumulation on the MXU).
    h2 = jnp.dot(h1.astype(w2_ref.dtype), w2_ref[...],
                 preferred_element_type=jnp.float32)
    h2 = jnp.maximum(h2 + b2_ref[...], 0.0)

    # fc3 (unbounded Q-value, no activation).
    q = jnp.dot(h2.astype(w3_ref.dtype), w3_ref[...],
                preferred_element_type=jnp.float32)
    o_ref[...] = (q + b3_ref[...]).astype(o_ref.dtype)


def prepare_critic_params(params, n_state, n_action, *,
                          compute_dtype=jnp.bfloat16):
    """One-time param prep (call at init, NOT per forward call).

    `params = (w1, b1, w2, b2, w3, b3)` with weights stored (in, out), i.e.
    the transpose of PyTorch's nn.Linear (out, in) layout.  W1 is split into
    its state-rows / action-rows; the hidden dim is zero-padded to a multiple
    of 128 lanes (exact: padded rows/cols contribute 0 through relu/linear).
    Biases stay f32 (they add into the f32 accumulators)."""
    w1, b1, w2, b2, w3, b3 = params
    n_features, n_hidden = w1.shape
    assert n_features == n_state + n_action
    n_outputs = w3.shape[1]
    h_pad = _round_up(n_hidden, _LANE)

    w1s = jnp.zeros((n_state, h_pad), compute_dtype)
    w1s = w1s.at[:, :n_hidden].set(w1[:n_state].astype(compute_dtype))
    w1a = jnp.zeros((n_action, h_pad), compute_dtype)
    w1a = w1a.at[:, :n_hidden].set(w1[n_state:].astype(compute_dtype))
    b1_p = jnp.zeros((1, h_pad), jnp.float32)
    b1_p = b1_p.at[:, :n_hidden].set(b1.reshape(1, -1).astype(jnp.float32))

    w2_p = jnp.zeros((h_pad, h_pad), compute_dtype)
    w2_p = w2_p.at[:n_hidden, :n_hidden].set(w2.astype(compute_dtype))
    b2_p = jnp.zeros((1, h_pad), jnp.float32)
    b2_p = b2_p.at[:, :n_hidden].set(b2.reshape(1, -1).astype(jnp.float32))

    w3_p = jnp.zeros((h_pad, n_outputs), compute_dtype)
    w3_p = w3_p.at[:n_hidden, :].set(w3.astype(compute_dtype))
    b3_p = b3.reshape(1, n_outputs).astype(jnp.float32)

    return (w1s, w1a, b1_p, w2_p, b2_p, w3_p, b3_p)


def critic_net_forward(state, action, prepared_params, *, block_batch=1024):
    """state: (B, n_state), action: (B, n_action);
    prepared_params from `prepare_critic_params`.  Returns q: (B, n_outputs)
    in float32."""
    w1s, w1a, b1, w2, b2, w3, b3 = prepared_params
    compute_dtype = w1s.dtype

    batch, n_state = state.shape
    n_action = action.shape[1]
    n_outputs = w3.shape[1]
    h_pad = w2.shape[0]

    # Batch handling: pad only to a multiple of 8 sublanes, derive the tile
    # from the step count (no round-up of the batch to a multiple of the tile).
    b8 = _round_up(batch, _SUBLANE)
    steps = pl.cdiv(b8, block_batch)
    if b8 >= 1024:
        # Guarantee >= 2 grid steps for large batches so v7x can shard the
        # "parallel" batch axis across both TensorCores.
        steps = max(steps, 2)
    tb = _round_up(pl.cdiv(b8, steps), _SUBLANE)
    b_pad = tb * steps

    state_c = state.astype(compute_dtype)
    action_c = action.astype(compute_dtype)
    if b_pad != batch:
        pad = b_pad - batch
        state_c = jnp.pad(state_c, ((0, pad), (0, 0)))
        action_c = jnp.pad(action_c, ((0, pad), (0, 0)))

    # Advisory cost hint for XLA's scheduler.
    itemsize = jnp.dtype(compute_dtype).itemsize
    flops = 2 * b_pad * ((n_state + n_action) * h_pad + h_pad * h_pad
                         + h_pad * n_outputs)
    bytes_accessed = (
        b_pad * (n_state + n_action) * itemsize       # batch-scaled inputs
        + b_pad * n_outputs * 4                       # f32 output
        + sum(int(w.size) * jnp.dtype(w.dtype).itemsize
              for w in (w1s, w1a, b1, w2, b2, w3, b3)))
    cost = pl.CostEstimate(flops=int(flops), transcendentals=0,
                           bytes_accessed=int(bytes_accessed))

    out = pl.pallas_call(
        _critic_kernel,
        out_shape=jax.ShapeDtypeStruct((b_pad, n_outputs), jnp.float32),
        grid_spec=pltpu.PrefetchScalarGridSpec(
            num_scalar_prefetch=0,
            grid=(steps,),
            in_specs=[
                # state / action: tiled along batch, natural feature widths
                # (last dim == full array dim is legal; no 128-lane padding).
                pl.BlockSpec((tb, n_state), lambda i: (i, 0)),
                pl.BlockSpec((tb, n_action), lambda i: (i, 0)),
                # weights / biases: constant block index -> DMA'd once and
                # resident in VMEM across all grid steps.
                pl.BlockSpec((n_state, h_pad), lambda i: (0, 0)),
                pl.BlockSpec((n_action, h_pad), lambda i: (0, 0)),
                pl.BlockSpec((1, h_pad), lambda i: (0, 0)),
                pl.BlockSpec((h_pad, h_pad), lambda i: (0, 0)),
                pl.BlockSpec((1, h_pad), lambda i: (0, 0)),
                pl.BlockSpec((h_pad, n_outputs), lambda i: (0, 0)),
                pl.BlockSpec((1, n_outputs), lambda i: (0, 0)),
            ],
            # Output kept at its natural (narrow) width: no 128-lane padding.
            out_specs=pl.BlockSpec((tb, n_outputs), lambda i: (i, 0)),
        ),
        compiler_params=pltpu.CompilerParams(
            # Batch axis is independent -> shard across both TCs on v7x.
            dimension_semantics=("parallel",),
        ),
        cost_estimate=cost,
    )(state_c, action_c, w1s, w1a, b1, w2, b2, w3, b3)

    return out[:batch]


def init_critic_params(key, n_features, n_hidden, n_outputs):
    """Deterministic init.  Weights stored (in, out) — transpose of PyTorch's
    (out, in) nn.Linear layout.  Values are arbitrary small randoms; the
    forward-pass semantics are what must match the PyTorch module."""
    k1, k2, k3 = jax.random.split(key, 3)
    w1 = 0.1 * jax.random.normal(k1, (n_features, n_hidden), dtype=jnp.float32)
    b1 = jnp.full((1, n_hidden), 0.1, dtype=jnp.float32)
    w2 = 0.1 * jax.random.normal(k2, (n_hidden, n_hidden), dtype=jnp.float32)
    b2 = jnp.full((1, n_hidden), 0.1, dtype=jnp.float32)
    w3 = 0.1 * jax.random.normal(k3, (n_hidden, n_outputs), dtype=jnp.float32)
    b3 = jnp.full((1, n_outputs), 0.1, dtype=jnp.float32)
    return w1, b1, w2, b2, w3, b3


if __name__ == "__main__":
    # Small shapes consistent with a DDPG critic (Pendulum-like env):
    # n_features = state_dim + action_dim (fc1 consumes the concatenation).
    batch, n_state, n_action = 8, 3, 1
    n_features = n_state + n_action
    n_hidden, n_outputs = 32, 1

    key = jax.random.PRNGKey(0)
    ks, ka, kp = jax.random.split(key, 3)
    state = jax.random.normal(ks, (batch, n_state), dtype=jnp.float32)
    action = jax.random.normal(ka, (batch, n_action), dtype=jnp.float32)
    params = init_critic_params(kp, n_features, n_hidden, n_outputs)

    # Pure-JAX reference of the same forward pass.
    w1, b1, w2, b2, w3, b3 = params
    xcat = jnp.concatenate([state, action], axis=1)
    h1_ref = jnp.maximum(xcat @ w1 + b1, 0.0)
    h2_ref = jnp.maximum(h1_ref @ w2 + b2, 0.0)
    q_ref = h2_ref @ w3 + b3

    # Exact-numerics path (f32 compute) — tight tolerance.
    prepared_f32 = prepare_critic_params(params, n_state, n_action,
                                         compute_dtype=jnp.float32)
    q = jax.block_until_ready(critic_net_forward(state, action, prepared_f32))
    assert q.shape == (batch, n_outputs)
    assert jnp.allclose(q, q_ref, atol=1e-5, rtol=1e-5)

    # Default bf16 operand path (v6e/v7x recommendation) — loose tolerance.
    prepared_bf16 = prepare_critic_params(params, n_state, n_action)
    q_bf16 = jax.block_until_ready(
        critic_net_forward(state, action, prepared_bf16))
    assert q_bf16.shape == (batch, n_outputs)
    assert jnp.allclose(q_bf16, q_ref, atol=1e-1, rtol=1e-1)

    # TODO(synk): optim.Adam / training step is not part of the forward pass
    # and is intentionally not implemented in the kernel.
    print("KERNEL_OK")
</pallas_src>

<mosaic_0001>
module attributes {stable_mosaic.version = 11 : i64} {
  func.func @_critic_kernel(%arg0: i32, %arg1: memref<8x3xf32, #tpu.memory_space<vmem>>, %arg2: memref<8x1xf32, #tpu.memory_space<vmem>>, %arg3: memref<3x128xf32, #tpu.memory_space<vmem>>, %arg4: memref<1x128xf32, #tpu.memory_space<vmem>>, %arg5: memref<1x128xf32, #tpu.memory_space<vmem>>, %arg6: memref<128x128xf32, #tpu.memory_space<vmem>>, %arg7: memref<1x128xf32, #tpu.memory_space<vmem>>, %arg8: memref<128x1xf32, #tpu.memory_space<vmem>>, %arg9: memref<1x1xf32, #tpu.memory_space<vmem>>, %arg10: memref<8x1xf32, #tpu.memory_space<vmem>>) attributes {dimension_semantics = [#tpu.dimension_semantics<parallel>], iteration_bounds = array<i64: 1>, scalar_prefetch = 0 : i64, scratch_operands = 0 : i64, tpu.core_type = #tpu.core_type<tc>, window_params = [{transform_indices = @transform_0, window_bounds = array<i64: 8, 3>}, {transform_indices = @transform_1, window_bounds = array<i64: 8, 1>}, {pipeline_mode = #tpu.pipeline_mode<synchronous>, transform_indices = @transform_2, window_bounds = array<i64: 3, 128>}, {pipeline_mode = #tpu.pipeline_mode<synchronous>, transform_indices = @transform_3, window_bounds = array<i64: 1, 128>}, {pipeline_mode = #tpu.pipeline_mode<synchronous>, transform_indices = @transform_4, window_bounds = array<i64: 1, 128>}, {pipeline_mode = #tpu.pipeline_mode<synchronous>, transform_indices = @transform_5, window_bounds = array<i64: 128, 128>}, {pipeline_mode = #tpu.pipeline_mode<synchronous>, transform_indices = @transform_6, window_bounds = array<i64: 1, 128>}, {pipeline_mode = #tpu.pipeline_mode<synchronous>, transform_indices = @transform_7, window_bounds = array<i64: 128, 1>}, {pipeline_mode = #tpu.pipeline_mode<synchronous>, transform_indices = @transform_8, window_bounds = array<i64: 1, 1>}, {transform_indices = @transform_9, window_bounds = array<i64: 8, 1>}]} {
    %c0 = arith.constant 0 : index
    %c0_0 = arith.constant 0 : index
    %0 = vector.load %arg1[%c0, %c0_0] : memref<8x3xf32, #tpu.memory_space<vmem>>, vector<8x3xf32>
    %c0_1 = arith.constant 0 : index
    %c0_2 = arith.constant 0 : index
    %1 = vector.load %arg3[%c0_1, %c0_2] : memref<3x128xf32, #tpu.memory_space<vmem>>, vector<3x128xf32>
    %cst = arith.constant dense<0.000000e+00> : vector<8x128xf32>
    %2 = tpu.matmul %0, %1, %cst {dimension_numbers = #tpu.dot_dimension_numbers<[1], [0], [0], [1], [0, 0, 1, 1], [], []>} : vector<8x3xf32>, vector<3x128xf32>, vector<8x128xf32> -> vector<8x128xf32>
    %c0_3 = arith.constant 0 : index
    %c0_4 = arith.constant 0 : index
    %3 = vector.load %arg2[%c0_3, %c0_4] : memref<8x1xf32, #tpu.memory_space<vmem>>, vector<8x1xf32>
    %c0_5 = arith.constant 0 : index
    %c0_6 = arith.constant 0 : index
    %4 = vector.load %arg4[%c0_5, %c0_6] : memref<1x128xf32, #tpu.memory_space<vmem>>, vector<1x128xf32>
    %cst_7 = arith.constant dense<0.000000e+00> : vector<8x128xf32>
    %5 = tpu.matmul %3, %4, %cst_7 {dimension_numbers = #tpu.dot_dimension_numbers<[1], [0], [0], [1], [0, 0, 1, 1], [], []>} : vector<8x1xf32>, vector<1x128xf32>, vector<8x128xf32> -> vector<8x128xf32>
    %6 = arith.addf %2, %5 : vector<8x128xf32>
    %c0_8 = arith.constant 0 : index
    %c0_9 = arith.constant 0 : index
    %7 = vector.load %arg5[%c0_8, %c0_9] : memref<1x128xf32, #tpu.memory_space<vmem>>, vector<1x128xf32>
    %8 = vector.broadcast %7 : vector<1x128xf32> to vector<8x128xf32>
    %9 = arith.addf %6, %8 : vector<8x128xf32>
    %cst_10 = arith.constant 0.000000e+00 : f32
    %10 = vector.broadcast %cst_10 : f32 to vector<8x128xf32>
    %11 = arith.maximumf %9, %10 : vector<8x128xf32>
    %c0_11 = arith.constant 0 : index
    %c0_12 = arith.constant 0 : index
    %12 = vector.load %arg6[%c0_11, %c0_12] : memref<128x128xf32, #tpu.memory_space<vmem>>, vector<128x128xf32>
    %cst_13 = arith.constant dense<0.000000e+00> : vector<8x128xf32>
    %13 = tpu.matmul %11, %12, %cst_13 {dimension_numbers = #tpu.dot_dimension_numbers<[1], [0], [0], [1], [0, 0, 1, 1], [], []>} : vector<8x128xf32>, vector<128x128xf32>, vector<8x128xf32> -> vector<8x128xf32>
    %c0_14 = arith.constant 0 : index
    %c0_15 = arith.constant 0 : index
    %14 = vector.load %arg7[%c0_14, %c0_15] : memref<1x128xf32, #tpu.memory_space<vmem>>, vector<1x128xf32>
    %15 = vector.broadcast %14 : vector<1x128xf32> to vector<8x128xf32>
    %16 = arith.addf %13, %15 : vector<8x128xf32>
    %cst_16 = arith.constant 0.000000e+00 : f32
    %17 = vector.broadcast %cst_16 : f32 to vector<8x128xf32>
    %18 = arith.maximumf %16, %17 : vector<8x128xf32>
    %c0_17 = arith.constant 0 : index
    %c0_18 = arith.constant 0 : index
    %19 = vector.load %arg8[%c0_17, %c0_18] : memref<128x1xf32, #tpu.memory_space<vmem>>, vector<128x1xf32>
    %cst_19 = arith.constant dense<0.000000e+00> : vector<8x1xf32>
    %20 = tpu.matmul %18, %19, %cst_19 {dimension_numbers = #tpu.dot_dimension_numbers<[1], [0], [0], [1], [0, 0, 1, 1], [], []>} : vector<8x128xf32>, vector<128x1xf32>, vector<8x1xf32> -> vector<8x1xf32>
    %c0_20 = arith.constant 0 : index
    %c0_21 = arith.constant 0 : index
    %21 = vector.load %arg9[%c0_20, %c0_21] : memref<1x1xf32, #tpu.memory_space<vmem>>, vector<1x1xf32>
    %22 = vector.broadcast %21 : vector<1x1xf32> to vector<8x1xf32>
    %23 = arith.addf %20, %22 : vector<8x1xf32>
    %c0_22 = arith.constant 0 : index
    %c0_23 = arith.constant 0 : index
    %24 = vector.load %arg10[%c0_22, %c0_23] : memref<8x1xf32, #tpu.memory_space<vmem>>, vector<8x1xf32>
    tpu.vector_store %arg10[%c0_22, %c0_23], %23 {strides = array<i32>} : memref<8x1xf32, #tpu.memory_space<vmem>>, vector<8x1xf32>,
    return
  }
  func.func @transform_0(%arg0: i32) -> (i32, i32) {
    %c0_i32 = arith.constant 0 : i32
    %c0_i32_0 = arith.constant 0 : i32
    return %arg0, %c0_i32 : i32, i32
  }
  func.func @transform_1(%arg0: i32) -> (i32, i32) {
    %c0_i32 = arith.constant 0 : i32
    %c0_i32_0 = arith.constant 0 : i32
    return %arg0, %c0_i32 : i32, i32
  }
  func.func @transform_2(%arg0: i32) -> (i32, i32) {
    %c0_i32 = arith.constant 0 : i32
    %c0_i32_0 = arith.constant 0 : i32
    %c0_i32_1 = arith.constant 0 : i32
    return %c0_i32, %c0_i32_0 : i32, i32
  }
  func.func @transform_3(%arg0: i32) -> (i32, i32) {
    %c0_i32 = arith.constant 0 : i32
    %c0_i32_0 = arith.constant 0 : i32
    %c0_i32_1 = arith.constant 0 : i32
    return %c0_i32, %c0_i32_0 : i32, i32
  }
  func.func @transform_4(%arg0: i32) -> (i32, i32) {
    %c0_i32 = arith.constant 0 : i32
    %c0_i32_0 = arith.constant 0 : i32
    %c0_i32_1 = arith.constant 0 : i32
    return %c0_i32, %c0_i32_0 : i32, i32
  }
  func.func @transform_5(%arg0: i32) -> (i32, i32) {
    %c0_i32 = arith.constant 0 : i32
    %c0_i32_0 = arith.constant 0 : i32
    %c0_i32_1 = arith.constant 0 : i32
    return %c0_i32, %c0_i32_0 : i32, i32
  }
  func.func @transform_6(%arg0: i32) -> (i32, i32) {
    %c0_i32 = arith.constant 0 : i32
    %c0_i32_0 = arith.constant 0 : i32
    %c0_i32_1 = arith.constant 0 : i32
    return %c0_i32, %c0_i32_0 : i32, i32
  }
  func.func @transform_7(%arg0: i32) -> (i32, i32) {
    %c0_i32 = arith.constant 0 : i32
    %c0_i32_0 = arith.constant 0 : i32
    %c0_i32_1 = arith.constant 0 : i32
    return %c0_i32, %c0_i32_0 : i32, i32
  }
  func.func @transform_8(%arg0: i32) -> (i32, i32) {
    %c0_i32 = arith.constant 0 : i32
    %c0_i32_0 = arith.constant 0 : i32
    %c0_i32_1 = arith.constant 0 : i32
    return %c0_i32, %c0_i32_0 : i32, i32
  }
  func.func @transform_9(%arg0: i32) -> (i32, i32) {
    %c0_i32 = arith.constant 0 : i32
    %c0_i32_0 = arith.constant 0 : i32
    return %arg0, %c0_i32 : i32, i32
  }
}

</mosaic_0001>

<llo_original>
// kernel: tpu_custom_call.1
$region0: #{tpu_custom_call.1}
  #allocation0 [shape = 'u32[]', space=smem, size = 0x4, offset = 0x4, fixed_abs, tag = 'smem constant byte address 0x4 - core index']
  #allocation1 [shape = 'u32[72,128]{1,0:T(1,128)}', space=vmem, size = 0x9000, scoped, tag = 'internal scratch']
  #allocation2 [shape = 'f32[1,1]{1,0:T(1,128)S(1)}', space=vmem, size = 0x200, scoped, tag = 'scoped memory for tpu_custom_call.1']
  %s0 = inlined_call_operand.vmem [shape: f32[8,3], index: 0, kind: input, shape index: {}]
  %s1 = inlined_call_operand.vmem [shape: f32[8,1], index: 1, kind: input, shape index: {}]
  %s2 = inlined_call_operand.vmem [shape: f32[3,128], index: 2, kind: input, shape index: {}]
  %s3 = inlined_call_operand.vmem [shape: f32[1,128], index: 3, kind: input, shape index: {}]
  %s4 = inlined_call_operand.vmem [shape: f32[1,128], index: 4, kind: input, shape index: {}]
  %s5 = inlined_call_operand.vmem [shape: f32[128,128], index: 5, kind: input, shape index: {}]
  %s6 = inlined_call_operand.vmem [shape: f32[1,128], index: 6, kind: input, shape index: {}]
  %s7 = inlined_call_operand.vmem [shape: f32[128,1], index: 7, kind: input, shape index: {}]
  %s8 = inlined_call_operand.<no memory space> [shape: f32[1,1], index: 8, kind: input, shape index: {}]
  %s9 = inlined_call_operand.vmem [shape: f32[8,1], index: 9, kind: output, shape index: {}]
  %s10 = sld [smem:[#allocation0]]
  $region46: #{tpu_custom_call.1} parent=0
    _
  %s12 = ssub.s32 1, %s10
  %s13 = scalar_select 0, %s12, %s10
  %v14 = vstv %s8
  %15 = vst [vmem:[#allocation2] sm:$0x1] %v14
  // Predicated region
  $region2: #{tpu_custom_call.1} parent=0 // pred_check
    _
  $region3: #{tpu_custom_call.1} parent=0 // pred_check_branch
    %17 = sbr.rel (0) target = $region5
  $region4: #{tpu_custom_call.1} parent=0 // pred_region
    _
  $region5: #{tpu_custom_call.1} parent=0 // pred_fallthru
    _
  // Predicated region
  $region6: #{tpu_custom_call.1} parent=0 // pred_check
    _
  $region7: #{tpu_custom_call.1} parent=0 // pred_check_branch
    %19 = sbr.rel (0) target = $region9
  $region8: #{tpu_custom_call.1} parent=0 // pred_region
    _
  $region9: #{tpu_custom_call.1} parent=0 // pred_fallthru
    _
  // Predicated region
  $region10: #{tpu_custom_call.1} parent=0 // pred_check
    _
  $region11: #{tpu_custom_call.1} parent=0 // pred_check_branch
    %21 = sbr.rel (0) target = $region13
  $region12: #{tpu_custom_call.1} parent=0 // pred_region
    _
  $region13: #{tpu_custom_call.1} parent=0 // pred_fallthru
    _
  // Predicated region
  $region14: #{tpu_custom_call.1} parent=0 // pred_check
    _
  $region15: #{tpu_custom_call.1} parent=0 // pred_check_branch
    %23 = sbr.rel (0) target = $region17
  $region16: #{tpu_custom_call.1} parent=0 // pred_region
    _
  $region17: #{tpu_custom_call.1} parent=0 // pred_fallthru
    _
  // Predicated region
  $region18: #{tpu_custom_call.1} parent=0 // pred_check
    _
  $region19: #{tpu_custom_call.1} parent=0 // pred_check_branch
    %25 = sbr.rel (0) target = $region21
  $region20: #{tpu_custom_call.1} parent=0 // pred_region
    _
  $region21: #{tpu_custom_call.1} parent=0 // pred_fallthru
    _
  // Predicated region
  $region22: #{tpu_custom_call.1} parent=0 // pred_check
    _
  $region23: #{tpu_custom_call.1} parent=0 // pred_check_branch
    %27 = sbr.rel (0) target = $region25
  $region24: #{tpu_custom_call.1} parent=0 // pred_region
    _
  $region25: #{tpu_custom_call.1} parent=0 // pred_fallthru
    _
  // Predicated region
  $region26: #{tpu_custom_call.1} parent=0 // pred_check
    _
  $region27: #{tpu_custom_call.1} parent=0 // pred_check_branch
    %29 = sbr.rel (0) target = $region29
  $region28: #{tpu_custom_call.1} parent=0 // pred_region
    _
  $region29: #{tpu_custom_call.1} parent=0 // pred_fallthru
    _
  // Predicated region
  $region30: #{tpu_custom_call.1} parent=0 // pred_check
    _
  $region31: #{tpu_custom_call.1} parent=0 // pred_check_branch
    %31 = sbr.rel (0) target = $region33
  $region32: #{tpu_custom_call.1} parent=0 // pred_region
    _
  $region33: #{tpu_custom_call.1} parent=0 // pred_fallthru
    _
  // Predicated region
  $region34: #{tpu_custom_call.1} parent=0 // pred_check
    _
  $region35: #{tpu_custom_call.1} parent=0 // pred_check_branch
    %33 = sbr.rel (0) target = $region37
  $region36: #{tpu_custom_call.1} parent=0 // pred_region
    _
  $region37: #{tpu_custom_call.1} parent=0 // pred_fallthru
    _
  %v34 = vld [vmem:[%s0] sm:$0xff]
  %v35 = vld [vmem:[%s2] sm:$0x7]
  %v36 = vld [vmem:[%s1] sm:$0xff]
  %v37 = vld [vmem:[%s3] sm:$0x1]
  %vm38 = vcmask 7168
  %v40 = vsel %vm38, %v36, 0
  %vm42 = vcmask 1040384
  %v44 = vsel %vm42, %v37, 0
  %46 = vmatpush.msra.mxu0 0.0
  %47 = vmatpush.msra.mxu0 0.0
  %48 = vmatpush.msra.mxu0 0.0
  %49 = vmatpush.msra.mxu0 0.0
  %50 = vmatpush.msra.mxu0 0.0
  %51 = vmatpush.msra.mxu0 0.0
  %52 = vmatpush.msra.mxu0 0.0
  %53 = vmatpush.msra.mxu0 0.0
  %54 = vmatpush.msra.mxu0 0.0
  %55 = vmatpush.msra.mxu0 0.0
  %56 = vmatpush.msra.mxu0 0.0
  %57 = vmatpush.msra.mxu0 0.0
  %58 = vmatpush.msra.mxu0 0.0
  %59 = vmatpush.msra.mxu0 0.0
  %60 = vmatpush.msra.mxu0 0.0
  %61 = vmatpush.msra.mxu0 %v44
  %62 = vmatmul.f32.gmra.mxu0 %v40
  %v63 = vpop.f32.mrf.mxu0
  %v64 = vadd.f32 0.0, %v63
  %65 = vdwg.mxu0
  %vm66 = vcmask 23552
  %v68 = vsel %vm66, %v34, 0
  %vm70 = vcmask 1042432
  %v72 = vsel %vm70, %v35, 0
  %74 = vmatpush.msra.mxu0 0.0
  %75 = vmatpush.msra.mxu0 0.0
  %76 = vmatpush.msra.mxu0 0.0
  %77 = vmatpush.msra.mxu0 0.0
  %78 = vmatpush.msra.mxu0 0.0
  %79 = vmatpush.msra.mxu0 0.0
  %80 = vmatpush.msra.mxu0 0.0
  %81 = vmatpush.msra.mxu0 0.0
  %82 = vmatpush.msra.mxu0 0.0
  %83 = vmatpush.msra.mxu0 0.0
  %84 = vmatpush.msra.mxu0 0.0
  %85 = vmatpush.msra.mxu0 0.0
  %86 = vmatpush.msra.mxu0 0.0
  %87 = vmatpush.msra.mxu0 0.0
  %88 = vmatpush.msra.mxu0 0.0
  %89 = vmatpush.msra.mxu0 %v72
  %90 = vmatmul.f32.gmra.mxu0 %v68
  %v91 = vpop.f32.mrf.mxu0
  %v92 = vadd.f32 %v64, %v91
  %93 = vdwg.mxu0
  %v94 = vld [vmem:[%s4] sm:$0x1]
  %v96 = vperm.slane %v94, 0
  %v98 = vadd.f32 %v92, %v96
  %v99 = vmax.f32 %v98, 0.0
  %v100 = vld [vmem:[%s5] sm:$0xff]
  %v101 = vld [vmem:[%s5 + $0x8] sm:$0xff]
  %v102 = vld [vmem:[%s5 + $0x10] sm:$0xff]
  %v103 = vld [vmem:[%s5 + $0x18] sm:$0xff]
  %v104 = vld [vmem:[%s5 + $0x20] sm:$0xff]
  %v105 = vld [vmem:[%s5 + $0x28] sm:$0xff]
  %v106 = vld [vmem:[%s5 + $0x30] sm:$0xff]
  %v107 = vld [vmem:[%s5 + $0x38] sm:$0xff]
  %v108 = vld [vmem:[%s5 + $0x40] sm:$0xff]
  %v109 = vld [vmem:[%s5 + $0x48] sm:$0xff]
  %v110 = vld [vmem:[%s5 + $0x50] sm:$0xff]
  %v111 = vld [vmem:[%s5 + $0x58] sm:$0xff]
  %v112 = vld [vmem:[%s5 + $0x60] sm:$0xff]
  %v113 = vld [vmem:[%s5 + $0x68] sm:$0xff]
  %v114 = vld [vmem:[%s5 + $0x70] sm:$0xff]
  %v115 = vld [vmem:[%s5 + $0x78] sm:$0xff]
  %v116 = vld [vmem:[%s6] sm:$0x1]
  %v118 = vperm.slane %v116, 0
  %120 = vmatpush.msra.mxu0 %v115
  %121 = vmatpush.msra.mxu0 %v114
  %122 = vmatpush.msra.mxu0 %v113
  %123 = vmatpush.msra.mxu0 %v112
  %124 = vmatpush.msra.mxu0 %v111
  %125 = vmatpush.msra.mxu0 %v110
  %126 = vmatpush.msra.mxu0 %v109
  %127 = vmatpush.msra.mxu0 %v108
  %128 = vmatpush.msra.mxu0 %v107
  %129 = vmatpush.msra.mxu0 %v106
  %130 = vmatpush.msra.mxu0 %v105
  %131 = vmatpush.msra.mxu0 %v104
  %132 = vmatpush.msra.mxu0 %v103
  %133 = vmatpush.msra.mxu0 %v102
  %134 = vmatpush.msra.mxu0 %v101
  %135 = vmatpush.msra.mxu0 %v100
  %136 = vmatmul.f32.gmra.mxu0 %v99
  %v137 = vpop.f32.mrf.mxu0
  %v138 = vadd.f32 %v118, %v137
  %139 = vdwg.mxu0
  %v140 = vmax.f32 %v138, 0.0
  %v141 = vld [vmem:[%s7] sm:$0xff]
  %v142 = vld [vmem:[%s7 + $0x8] sm:$0xff]
  %v143 = vld [vmem:[%s7 + $0x10] sm:$0xff]
  %v144 = vld [vmem:[%s7 + $0x18] sm:$0xff]
  %v145 = vld [vmem:[%s7 + $0x20] sm:$0xff]
  %v146 = vld [vmem:[%s7 + $0x28] sm:$0xff]
  %v147 = vld [vmem:[%s7 + $0x30] sm:$0xff]
  %v148 = vld [vmem:[%s7 + $0x38] sm:$0xff]
  %v149 = vld [vmem:[%s7 + $0x40] sm:$0xff]
  %v150 = vld [vmem:[%s7 + $0x48] sm:$0xff]
  %v151 = vld [vmem:[%s7 + $0x50] sm:$0xff]
  %v152 = vld [vmem:[%s7 + $0x58] sm:$0xff]
  %v153 = vld [vmem:[%s7 + $0x60] sm:$0xff]
  %v154 = vld [vmem:[%s7 + $0x68] sm:$0xff]
  %v155 = vld [vmem:[%s7 + $0x70] sm:$0xff]
  %v156 = vld [vmem:[%s7 + $0x78] sm:$0xff]
  %v157 = vld [vmem:[#allocation2] sm:$0x1]
  %v159 = vperm.slane %v157, 0
  %161 = vmatpush.msra.mxu0 %v156
  %162 = vmatpush.msra.mxu0 %v155
  %163 = vmatpush.msra.mxu0 %v154
  %164 = vmatpush.msra.mxu0 %v153
  %165 = vmatpush.msra.mxu0 %v152
  %166 = vmatpush.msra.mxu0 %v151
  %167 = vmatpush.msra.mxu0 %v150
  %168 = vmatpush.msra.mxu0 %v149
  %169 = vmatpush.msra.mxu0 %v148
  %170 = vmatpush.msra.mxu0 %v147
  %171 = vmatpush.msra.mxu0 %v146
  %172 = vmatpush.msra.mxu0 %v145
  %173 = vmatpush.msra.mxu0 %v144
  %174 = vmatpush.msra.mxu0 %v143
  %175 = vmatpush.msra.mxu0 %v142
  %176 = vmatpush.msra.mxu0 %v141
  %177 = vmatmul.f32.gmra.mxu0 %v140
  %v178 = vpop.f32.mrf.mxu0
  %v179 = vadd.f32 %v159, %v178
  %180 = vdwg.mxu0
  %181 = vst.msk [vmem:[%s9] sm:$0xff] %vm38, %v179
  // Predicated region
  $region38: #{tpu_custom_call.1} parent=0 // pred_check
    _
  $region39: #{tpu_custom_call.1} parent=0 // pred_check_branch
    %183 = sbr.rel (0) target = $region41
  $region40: #{tpu_custom_call.1} parent=0 // pred_region
    _
  $region41: #{tpu_custom_call.1} parent=0 // pred_fallthru
    _
  // Predicated region
  $region42: #{tpu_custom_call.1} parent=0 // pred_check
    _
  $region43: #{tpu_custom_call.1} parent=0 // pred_check_branch
    %185 = sbr.rel (0) target = $region45
  $region44: #{tpu_custom_call.1} parent=0 // pred_region
    _
  $region45: #{tpu_custom_call.1} parent=0 // pred_fallthru
    _

</llo_original>
